<compile_context>
chip_gen: v7x
topology: tpu7x:2x2x1
jax: 0.10.0
libtpu: 0.0.40
codegen_flags: <defaults>
</compile_context>

<pallas_src>
import functools

import jax
import jax.numpy as jnp
from jax.experimental import pallas as pl
from jax.experimental.pallas import tpu as pltpu

N_CLASSES = 20      # n_classes=20 in the Graphonomy net
C_IN = 3            # RGB input
SIZE = 5            # erosion structuring-element size (from the module)

MAX_PIX_TILE = 16384          # classify pixel-tile cap (multiple of 128)
ERODE_TARGET_PX = 131072      # ~0.5 MB per f32 temp inside the erode kernel
VMEM_LIMIT = 32 * 1024 * 1024

# circular 5x5 kernel taps (dy^2 + dx^2 < (5/2)^2, exactly as in the module);
# row widths are (3, 5, 5, 5, 3) for dy = -2..2.
_EROSION_OFFSETS = tuple(
    (dy, dx)
    for dy in range(-(SIZE // 2), SIZE // 2 + 1)
    for dx in range(-(SIZE // 2), SIZE // 2 + 1)
    if (dy * dy + dx * dx) < (SIZE / 2.0) ** 2
)


def _cdiv(a, b):
    return -(-a // b)


# --------------------------------------------------------------------------- #
# Kernel 1: 1x1-conv class head + softmax + (1 - background prob), flat pixels #
# --------------------------------------------------------------------------- #
def _classify_kernel(x_ref, w_ref, b_ref, o_ref):
    x = x_ref[0].astype(jnp.float32)      # (C_IN, T) pixels, RGB order
    w = w_ref[...].astype(jnp.float32)    # (N_CLASSES, C_IN), BGR swap folded in
    b = b_ref[...].astype(jnp.float32)    # (N_CLASSES, 1)

    # 1x1 conv classification head, unrolled over C_IN=3 (VPU FMAs that
    # co-issue with the EUP exp stream; no (N_CLASSES, C_IN, T) temporary).
    logits = b
    for cc in range(C_IN):
        logits = logits + w[:, cc:cc + 1] * x[cc:cc + 1, :]   # (N_CLASSES, T)

    # softmax over classes; only the background probability is needed.
    m = jnp.max(logits, axis=0, keepdims=True)          # (1, T)
    e = jnp.exp(logits - m)                              # (N_CLASSES, T)
    s = jnp.sum(e, axis=0, keepdims=True)                # (1, T)
    e0 = e[0:1, :]
    inv = pl.reciprocal(s, approx=True)                  # EUP slot
    inv = inv * (2.0 - s * inv)                          # one Newton refinement
    o_ref[0] = ((s - e0) * inv).astype(o_ref.dtype)      # 1 - P(background)


# --------------------------------------------------------------------------- #
# Kernel 2: circular-5x5 grayscale erosion, row-tiled with a 2-row halo        #
# --------------------------------------------------------------------------- #
def _erode_kernel(top_ref, mid_ref, bot_ref, o_ref, *, tile_h, img_h, halo_rows):
    j = pl.program_id(1)
    inf = jnp.float32(jnp.inf)

    top = top_ref[0][halo_rows - 2:, :]        # last 2 rows just above this tile
    mid = mid_ref[0]                           # (TH, W) output rows
    bot = bot_ref[0][:2, :]                    # first 2 rows just below this tile
    work = jnp.concatenate([top, mid, bot], axis=0)     # (TH + 4, W)
    rows, wd = work.shape

    # +inf outside the image (matches cv2.erode's default border handling).
    # One row-validity select covers the top/bottom image borders, the clamped
    # halo blocks of the first/last tile and OOB rows of a partial last tile.
    g = j * tile_h - 2 + jax.lax.broadcasted_iota(jnp.int32, (rows, 1), 0)
    work = jnp.where((g >= 0) & (g < img_h), work, inf)

    col = jax.lax.broadcasted_iota(jnp.int32, (1, wd), 1)   # hoisted, (1, W)

    def tap(a, dx):
        # result[:, x] = a[:, x + dx];  +inf where x + dx is outside the image
        k = (-dx) % wd
        if k == 0:
            sh = a
        elif wd % 128 == 0:
            sh = pltpu.roll(a, k, axis=1)      # XLU lane rotate (free slot)
        else:
            sh = jnp.concatenate([a[:, wd - k:], a[:, :wd - k]], axis=1)
        valid = (col < wd - dx) if dx > 0 else (col >= -dx)
        return jnp.where(valid, sh, inf)

    # circular 5x5 kernel has horizontal widths (3, 5, 5, 5, 3) for dy=-2..2:
    h3 = jnp.minimum(work, jnp.minimum(tap(work, 1), tap(work, -1)))
    h5 = jnp.minimum(h3, jnp.minimum(tap(work, 2), tap(work, -2)))

    # vertical combine = static row slices of the halo'd block (no sublane
    # rolls, no row masks): output row r lives at work row r + 2.
    out = jnp.minimum(h5[2:2 + tile_h],
                      jnp.minimum(h5[1:1 + tile_h], h5[3:3 + tile_h]))
    out = jnp.minimum(out, jnp.minimum(h3[0:tile_h], h3[4:4 + tile_h]))

    o_ref[0] = out.astype(o_ref.dtype)


def _row_tile(h, w):
    """Output rows per erode block: multiple of 8, f32 temps kept ~0.5 MB."""
    rows = (ERODE_TARGET_PX // max(w, 1)) // 8 * 8
    rows = max(8, min(512, rows))
    return h if rows >= h else rows


@jax.jit
def segmentation_wrapper_forward(imgs, w, b):
    """imgs: (b, t, 3, H, W) float32 (RGB). Returns segs: (b*t, 1, H, W)."""
    bsz, t, c, h, wd = imgs.shape
    n = bsz * t
    hw = h * wd

    # rgb2bgr done for free by flipping the weight columns (identical math);
    # avoids materializing a channel-flipped copy of the full image tensor.
    w_bgr = w[:, ::-1]
    x_flat = imgs.reshape(n, c, hw)            # contiguous -> free reshape

    tile = hw if hw <= MAX_PIX_TILE else MAX_PIX_TILE
    n_tiles = _cdiv(hw, tile)                  # partial last tile masked by Pallas

    seg_flat = pl.pallas_call(
        _classify_kernel,
        out_shape=jax.ShapeDtypeStruct((n, 1, hw), jnp.float32),
        grid_spec=pltpu.PrefetchScalarGridSpec(
            num_scalar_prefetch=0,
            grid=(n, n_tiles),
            in_specs=[
                pl.BlockSpec((1, c, tile), lambda i, j: (i, 0, j)),
                pl.BlockSpec((N_CLASSES, C_IN), lambda i, j: (0, 0)),
                pl.BlockSpec((N_CLASSES, 1), lambda i, j: (0, 0)),
            ],
            out_specs=pl.BlockSpec((1, 1, tile), lambda i, j: (i, 0, j)),
        ),
        compiler_params=pltpu.CompilerParams(
            dimension_semantics=("parallel", "parallel"),
            vmem_limit_bytes=VMEM_LIMIT),
    )(x_flat, w_bgr, b)

    seg = seg_flat.reshape(n, h, wd)           # contiguous -> free reshape

    th = _row_tile(h, wd)                      # output rows per erode block
    hb = min(8, h)                             # halo-carrier block rows
    n_row = _cdiv(h, th)
    n_hb = _cdiv(h, hb)

    # Halo rows come from 8-row blocks just above / below the output tile;
    # block indices are clamped at the image edges (masked to +inf in-kernel).
    top_map = lambda i, j: (i, jnp.maximum(j * (th // hb) - 1, 0), 0)
    mid_map = lambda i, j: (i, j, 0)
    bot_map = lambda i, j: (i, jnp.minimum((j + 1) * (th // hb), n_hb - 1), 0)

    segs_eroded = pl.pallas_call(
        functools.partial(_erode_kernel, tile_h=th, img_h=h, halo_rows=hb),
        out_shape=jax.ShapeDtypeStruct((n, h, wd), jnp.float32),
        grid_spec=pltpu.PrefetchScalarGridSpec(
            num_scalar_prefetch=0,
            grid=(n, n_row),
            in_specs=[
                pl.BlockSpec((1, hb, wd), top_map),
                pl.BlockSpec((1, th, wd), mid_map),
                pl.BlockSpec((1, hb, wd), bot_map),
            ],
            out_specs=pl.BlockSpec((1, th, wd), mid_map),
        ),
        compiler_params=pltpu.CompilerParams(
            dimension_semantics=("parallel", "parallel"),
            vmem_limit_bytes=VMEM_LIMIT),
    )(seg, seg, seg)

    return segs_eroded[:, None]                # (N, 1, H, W)


def _reference(imgs, w, b):
    """Pure-JAX reference of the same forward math (for correctness check)."""
    bsz, t, c, h, wd = imgs.shape
    x = imgs.reshape(bsz * t, c, h, wd)[:, ::-1]                 # rgb2bgr
    logits = jnp.einsum("oc,nchw->nohw", w, x) + b[None, :, :, None]
    probs = jax.nn.softmax(logits, axis=1)
    seg = 1.0 - probs[:, 0]                                      # (N, H, W)
    row = jnp.arange(h)[:, None]
    col = jnp.arange(wd)[None, :]
    out = jnp.full_like(seg, jnp.inf)
    for dy, dx in _EROSION_OFFSETS:
        shifted = jnp.roll(seg, (-dy, -dx), axis=(1, 2))
        valid = ((row + dy >= 0) & (row + dy < h) &
                 (col + dx >= 0) & (col + dx < wd))
        out = jnp.minimum(out, jnp.where(valid[None], shifted, jnp.inf))
    return out[:, None]


if __name__ == "__main__":
    key = jax.random.PRNGKey(0)
    k_img, k_w, k_b = jax.random.split(key, 3)

    # small shapes consistent with the module: (b, t, 3, H, W)
    b_, t_, H, W = 2, 2, 16, 16
    imgs = jax.random.uniform(k_img, (b_, t_, C_IN, H, W), dtype=jnp.float32)

    # deterministic stand-in classification-head parameters
    w = 0.5 * jax.random.normal(k_w, (N_CLASSES, C_IN), dtype=jnp.float32)
    bias = 0.1 * jax.random.normal(k_b, (N_CLASSES, 1), dtype=jnp.float32)

    segs = segmentation_wrapper_forward(imgs, w, bias)
    segs = jax.block_until_ready(segs)

    assert segs.shape == (b_ * t_, 1, H, W), segs.shape
    assert bool(jnp.all(jnp.isfinite(segs)))

    ref = jax.block_until_ready(_reference(imgs, w, bias))
    # tolerance loosened from 1e-5 to 1e-4 for the approx-reciprocal
    # (+1 Newton step) softmax denominator, per the perf review.
    assert bool(jnp.allclose(segs, ref, atol=1e-4, rtol=1e-4)), float(
        jnp.max(jnp.abs(segs - ref)))

    print("KERNEL_OK")
</pallas_src>

<mosaic_0001>
module attributes {stable_mosaic.version = 11 : i64} {
  func.func @_classify_kernel(%arg0: i32, %arg1: i32, %arg2: memref<1x3x256xf32, #tpu.memory_space<vmem>>, %arg3: memref<20x3xf32, #tpu.memory_space<vmem>>, %arg4: memref<20x1xf32, #tpu.memory_space<vmem>>, %arg5: memref<1x1x256xf32, #tpu.memory_space<vmem>>) attributes {dimension_semantics = [#tpu.dimension_semantics<parallel>, #tpu.dimension_semantics<parallel>], iteration_bounds = array<i64: 4, 1>, scalar_prefetch = 0 : i64, scratch_operands = 0 : i64, tpu.core_type = #tpu.core_type<tc>, window_params = [{transform_indices = @transform_0, window_bounds = array<i64: 1, 3, 256>}, {pipeline_mode = #tpu.pipeline_mode<synchronous>, transform_indices = @transform_1, window_bounds = array<i64: 20, 3>}, {pipeline_mode = #tpu.pipeline_mode<synchronous>, transform_indices = @transform_2, window_bounds = array<i64: 20, 1>}, {transform_indices = @transform_3, window_bounds = array<i64: 1, 1, 256>}]} {
    %c0 = arith.constant 0 : index
    %c0_0 = arith.constant 0 : index
    %c0_1 = arith.constant 0 : index
    %0 = vector.load %arg2[%c0, %c0_0, %c0_1] : memref<1x3x256xf32, #tpu.memory_space<vmem>>, vector<1x3x256xf32>
    %1 = vector.shape_cast %0 : vector<1x3x256xf32> to vector<3x256xf32>
    %c0_2 = arith.constant 0 : index
    %c0_3 = arith.constant 0 : index
    %2 = vector.load %arg3[%c0_2, %c0_3] : memref<20x3xf32, #tpu.memory_space<vmem>>, vector<20x3xf32>
    %c0_4 = arith.constant 0 : index
    %c0_5 = arith.constant 0 : index
    %3 = vector.load %arg4[%c0_4, %c0_5] : memref<20x1xf32, #tpu.memory_space<vmem>>, vector<20x1xf32>
    %4 = vector.extract_strided_slice %2 {offsets = [0, 0], sizes = [20, 1], strides = [1, 1]} : vector<20x3xf32> to vector<20x1xf32>
    %5 = vector.extract_strided_slice %1 {offsets = [0, 0], sizes = [1, 256], strides = [1, 1]} : vector<3x256xf32> to vector<1x256xf32>
    %6 = vector.broadcast %4 : vector<20x1xf32> to vector<20x256xf32>
    %7 = vector.broadcast %5 : vector<1x256xf32> to vector<20x256xf32>
    %8 = arith.mulf %6, %7 : vector<20x256xf32>
    %9 = vector.broadcast %3 : vector<20x1xf32> to vector<20x256xf32>
    %10 = arith.addf %9, %8 : vector<20x256xf32>
    %11 = vector.extract_strided_slice %2 {offsets = [0, 1], sizes = [20, 1], strides = [1, 1]} : vector<20x3xf32> to vector<20x1xf32>
    %12 = vector.extract_strided_slice %1 {offsets = [1, 0], sizes = [1, 256], strides = [1, 1]} : vector<3x256xf32> to vector<1x256xf32>
    %13 = vector.broadcast %11 : vector<20x1xf32> to vector<20x256xf32>
    %14 = vector.broadcast %12 : vector<1x256xf32> to vector<20x256xf32>
    %15 = arith.mulf %13, %14 : vector<20x256xf32>
    %16 = arith.addf %10, %15 : vector<20x256xf32>
    %17 = vector.extract_strided_slice %2 {offsets = [0, 2], sizes = [20, 1], strides = [1, 1]} : vector<20x3xf32> to vector<20x1xf32>
    %18 = vector.extract_strided_slice %1 {offsets = [2, 0], sizes = [1, 256], strides = [1, 1]} : vector<3x256xf32> to vector<1x256xf32>
    %19 = vector.broadcast %17 : vector<20x1xf32> to vector<20x256xf32>
    %20 = vector.broadcast %18 : vector<1x256xf32> to vector<20x256xf32>
    %21 = arith.mulf %19, %20 : vector<20x256xf32>
    %22 = arith.addf %16, %21 : vector<20x256xf32>
    %cst = arith.constant dense<0xFF800000> : vector<256xf32>
    %23 = vector.multi_reduction <maximumf>, %22, %cst [0] : vector<20x256xf32> to vector<256xf32>
    %24 = vector.shape_cast %23 : vector<256xf32> to vector<1x256xf32>
    %25 = vector.broadcast %24 : vector<1x256xf32> to vector<20x256xf32>
    %26 = arith.subf %22, %25 : vector<20x256xf32>
    %27 = math.exp %26 : vector<20x256xf32>
    %cst_6 = arith.constant dense<0.000000e+00> : vector<256xf32>
    %28 = vector.multi_reduction <add>, %27, %cst_6 [0] : vector<20x256xf32> to vector<256xf32>
    %29 = vector.shape_cast %28 : vector<256xf32> to vector<1x256xf32>
    %30 = vector.extract_strided_slice %27 {offsets = [0, 0], sizes = [1, 256], strides = [1, 1]} : vector<20x256xf32> to vector<1x256xf32>
    %31 = tpu.reciprocal %29 {approx = true} : vector<1x256xf32> -> vector<1x256xf32>
    %32 = arith.mulf %29, %31 : vector<1x256xf32>
    %cst_7 = arith.constant 2.000000e+00 : f32
    %33 = vector.broadcast %cst_7 : f32 to vector<1x256xf32>
    %34 = arith.subf %33, %32 : vector<1x256xf32>
    %35 = arith.mulf %31, %34 : vector<1x256xf32>
    %36 = arith.subf %29, %30 : vector<1x256xf32>
    %37 = arith.mulf %36, %35 : vector<1x256xf32>
    %c0_8 = arith.constant 0 : index
    %c0_9 = arith.constant 0 : index
    %c0_10 = arith.constant 0 : index
    %38 = vector.load %arg5[%c0_8, %c0_9, %c0_10] : memref<1x1x256xf32, #tpu.memory_space<vmem>>, vector<1x1x256xf32>
    %39 = vector.shape_cast %38 : vector<1x1x256xf32> to vector<1x256xf32>
    %40 = vector.shape_cast %37 : vector<1x256xf32> to vector<1x1x256xf32>
    tpu.vector_store %arg5[%c0_8, %c0_9, %c0_10], %40 {strides = array<i32>} : memref<1x1x256xf32, #tpu.memory_space<vmem>>, vector<1x1x256xf32>,
    return
  }
  func.func @transform_0(%arg0: i32, %arg1: i32) -> (i32, i32, i32) {
    %c0_i32 = arith.constant 0 : i32
    %c0_i32_0 = arith.constant 0 : i32
    return %arg0, %c0_i32, %arg1 : i32, i32, i32
  }
  func.func @transform_1(%arg0: i32, %arg1: i32) -> (i32, i32) {
    %c0_i32 = arith.constant 0 : i32
    %c0_i32_0 = arith.constant 0 : i32
    %c0_i32_1 = arith.constant 0 : i32
    return %c0_i32, %c0_i32_0 : i32, i32
  }
  func.func @transform_2(%arg0: i32, %arg1: i32) -> (i32, i32) {
    %c0_i32 = arith.constant 0 : i32
    %c0_i32_0 = arith.constant 0 : i32
    %c0_i32_1 = arith.constant 0 : i32
    return %c0_i32, %c0_i32_0 : i32, i32
  }
  func.func @transform_3(%arg0: i32, %arg1: i32) -> (i32, i32, i32) {
    %c0_i32 = arith.constant 0 : i32
    %c0_i32_0 = arith.constant 0 : i32
    return %arg0, %c0_i32, %arg1 : i32, i32, i32
  }
}

module attributes {stable_mosaic.version = 11 : i64} {
  func.func @_erode_kernel(%arg0: i32, %arg1: i32, %arg2: memref<1x8x16xf32, #tpu.memory_space<vmem>>, %arg3: memref<1x16x16xf32, #tpu.memory_space<vmem>>, %arg4: memref<1x8x16xf32, #tpu.memory_space<vmem>>, %arg5: memref<1x16x16xf32, #tpu.memory_space<vmem>>) attributes {dimension_semantics = [#tpu.dimension_semantics<parallel>, #tpu.dimension_semantics<parallel>], iteration_bounds = array<i64: 4, 1>, scalar_prefetch = 0 : i64, scratch_operands = 0 : i64, tpu.core_type = #tpu.core_type<tc>, window_params = [{transform_indices = @transform_0, window_bounds = array<i64: 1, 8, 16>}, {transform_indices = @transform_1, window_bounds = array<i64: 1, 16, 16>}, {transform_indices = @transform_2, window_bounds = array<i64: 1, 8, 16>}, {transform_indices = @transform_3, window_bounds = array<i64: 1, 16, 16>}]} {
    %c0 = arith.constant 0 : index
    %c0_0 = arith.constant 0 : index
    %c0_1 = arith.constant 0 : index
    %0 = vector.load %arg2[%c0, %c0_0, %c0_1] : memref<1x8x16xf32, #tpu.memory_space<vmem>>, vector<1x8x16xf32>
    %1 = vector.shape_cast %0 : vector<1x8x16xf32> to vector<8x16xf32>
    %2 = vector.extract_strided_slice %1 {offsets = [6, 0], sizes = [2, 16], strides = [1, 1]} : vector<8x16xf32> to vector<2x16xf32>
    %c0_2 = arith.constant 0 : index
    %c0_3 = arith.constant 0 : index
    %c0_4 = arith.constant 0 : index
    %3 = vector.load %arg3[%c0_2, %c0_3, %c0_4] : memref<1x16x16xf32, #tpu.memory_space<vmem>>, vector<1x16x16xf32>
    %4 = vector.shape_cast %3 : vector<1x16x16xf32> to vector<16x16xf32>
    %c0_5 = arith.constant 0 : index
    %c0_6 = arith.constant 0 : index
    %c0_7 = arith.constant 0 : index
    %5 = vector.load %arg4[%c0_5, %c0_6, %c0_7] : memref<1x8x16xf32, #tpu.memory_space<vmem>>, vector<1x8x16xf32>
    %6 = vector.shape_cast %5 : vector<1x8x16xf32> to vector<8x16xf32>
    %7 = vector.extract_strided_slice %6 {offsets = [0, 0], sizes = [2, 16], strides = [1, 1]} : vector<8x16xf32> to vector<2x16xf32>
    %8 = tpu.concatenate %2, %4, %7 in 0 : vector<2x16xf32>, vector<16x16xf32>, vector<2x16xf32> -> vector<20x16xf32>
    %c16_i32 = arith.constant 16 : i32
    %9 = arith.muli %arg1, %c16_i32 : i32
    %c2_i32 = arith.constant 2 : i32
    %10 = arith.subi %9, %c2_i32 : i32
    %11 = tpu.iota {dimensions = array<i32: 0>} : vector<20x1xi32>
    %12 = vector.broadcast %10 : i32 to vector<20x1xi32>
    %13 = arith.addi %12, %11 : vector<20x1xi32>
    %c0_i32 = arith.constant 0 : i32
    %14 = vector.broadcast %c0_i32 : i32 to vector<20x1xi32>
    %15 = arith.cmpi sge, %13, %14 : vector<20x1xi32>
    %c16_i32_8 = arith.constant 16 : i32
    %16 = vector.broadcast %c16_i32_8 : i32 to vector<20x1xi32>
    %17 = arith.cmpi slt, %13, %16 : vector<20x1xi32>
    %18 = arith.andi %15, %17 : vector<20x1xi1>
    %cst = arith.constant 0x7F800000 : f32
    %19 = vector.shape_cast %18 : vector<20x1xi1> to vector<20x1xi1>
    %20 = vector.broadcast %19 : vector<20x1xi1> to vector<20x16xi1>
    %21 = vector.broadcast %cst : f32 to vector<20x16xf32>
    %22 = arith.select %20, %8, %21 : vector<20x16xi1>, vector<20x16xf32>
    %23 = tpu.iota {dimensions = array<i32: 1>} : vector<1x16xi32>
    %24 = vector.extract_strided_slice %22 {offsets = [0, 1], sizes = [20, 15], strides = [1, 1]} : vector<20x16xf32> to vector<20x15xf32>
    %25 = vector.extract_strided_slice %22 {offsets = [0, 0], sizes = [20, 1], strides = [1, 1]} : vector<20x16xf32> to vector<20x1xf32>
    %26 = tpu.concatenate %24, %25 in 1 : vector<20x15xf32>, vector<20x1xf32> -> vector<20x16xf32>
    %c15_i32 = arith.constant 15 : i32
    %27 = vector.broadcast %c15_i32 : i32 to vector<1x16xi32>
    %28 = arith.cmpi slt, %23, %27 : vector<1x16xi32>
    %cst_9 = arith.constant 0x7F800000 : f32
    %29 = vector.shape_cast %28 : vector<1x16xi1> to vector<1x16xi1>
    %30 = vector.broadcast %29 : vector<1x16xi1> to vector<20x16xi1>
    %31 = vector.broadcast %cst_9 : f32 to vector<20x16xf32>
    %32 = arith.select %30, %26, %31 : vector<20x16xi1>, vector<20x16xf32>
    %33 = vector.extract_strided_slice %22 {offsets = [0, 15], sizes = [20, 1], strides = [1, 1]} : vector<20x16xf32> to vector<20x1xf32>
    %34 = vector.extract_strided_slice %22 {offsets = [0, 0], sizes = [20, 15], strides = [1, 1]} : vector<20x16xf32> to vector<20x15xf32>
    %35 = tpu.concatenate %33, %34 in 1 : vector<20x1xf32>, vector<20x15xf32> -> vector<20x16xf32>
    %c1_i32 = arith.constant 1 : i32
    %36 = vector.broadcast %c1_i32 : i32 to vector<1x16xi32>
    %37 = arith.cmpi sge, %23, %36 : vector<1x16xi32>
    %cst_10 = arith.constant 0x7F800000 : f32
    %38 = vector.shape_cast %37 : vector<1x16xi1> to vector<1x16xi1>
    %39 = vector.broadcast %38 : vector<1x16xi1> to vector<20x16xi1>
    %40 = vector.broadcast %cst_10 : f32 to vector<20x16xf32>
    %41 = arith.select %39, %35, %40 : vector<20x16xi1>, vector<20x16xf32>
    %42 = arith.minimumf %32, %41 : vector<20x16xf32>
    %43 = arith.minimumf %22, %42 : vector<20x16xf32>
    %44 = vector.extract_strided_slice %22 {offsets = [0, 2], sizes = [20, 14], strides = [1, 1]} : vector<20x16xf32> to vector<20x14xf32>
    %45 = vector.extract_strided_slice %22 {offsets = [0, 0], sizes = [20, 2], strides = [1, 1]} : vector<20x16xf32> to vector<20x2xf32>
    %46 = tpu.concatenate %44, %45 in 1 : vector<20x14xf32>, vector<20x2xf32> -> vector<20x16xf32>
    %c14_i32 = arith.constant 14 : i32
    %47 = vector.broadcast %c14_i32 : i32 to vector<1x16xi32>
    %48 = arith.cmpi slt, %23, %47 : vector<1x16xi32>
    %cst_11 = arith.constant 0x7F800000 : f32
    %49 = vector.shape_cast %48 : vector<1x16xi1> to vector<1x16xi1>
    %50 = vector.broadcast %49 : vector<1x16xi1> to vector<20x16xi1>
    %51 = vector.broadcast %cst_11 : f32 to vector<20x16xf32>
    %52 = arith.select %50, %46, %51 : vector<20x16xi1>, vector<20x16xf32>
    %53 = vector.extract_strided_slice %22 {offsets = [0, 14], sizes = [20, 2], strides = [1, 1]} : vector<20x16xf32> to vector<20x2xf32>
    %54 = vector.extract_strided_slice %22 {offsets = [0, 0], sizes = [20, 14], strides = [1, 1]} : vector<20x16xf32> to vector<20x14xf32>
    %55 = tpu.concatenate %53, %54 in 1 : vector<20x2xf32>, vector<20x14xf32> -> vector<20x16xf32>
    %c2_i32_12 = arith.constant 2 : i32
    %56 = vector.broadcast %c2_i32_12 : i32 to vector<1x16xi32>
    %57 = arith.cmpi sge, %23, %56 : vector<1x16xi32>
    %cst_13 = arith.constant 0x7F800000 : f32
    %58 = vector.shape_cast %57 : vector<1x16xi1> to vector<1x16xi1>
    %59 = vector.broadcast %58 : vector<1x16xi1> to vector<20x16xi1>
    %60 = vector.broadcast %cst_13 : f32 to vector<20x16xf32>
    %61 = arith.select %59, %55, %60 : vector<20x16xi1>, vector<20x16xf32>
    %62 = arith.minimumf %52, %61 : vector<20x16xf32>
    %63 = arith.minimumf %43, %62 : vector<20x16xf32>
    %64 = vector.extract_strided_slice %63 {offsets = [2, 0], sizes = [16, 16], strides = [1, 1]} : vector<20x16xf32> to vector<16x16xf32>
    %65 = vector.extract_strided_slice %63 {offsets = [1, 0], sizes = [16, 16], strides = [1, 1]} : vector<20x16xf32> to vector<16x16xf32>
    %66 = vector.extract_strided_slice %63 {offsets = [3, 0], sizes = [16, 16], strides = [1, 1]} : vector<20x16xf32> to vector<16x16xf32>
    %67 = arith.minimumf %65, %66 : vector<16x16xf32>
    %68 = arith.minimumf %64, %67 : vector<16x16xf32>
    %69 = vector.extract_strided_slice %43 {offsets = [0, 0], sizes = [16, 16], strides = [1, 1]} : vector<20x16xf32> to vector<16x16xf32>
    %70 = vector.extract_strided_slice %43 {offsets = [4, 0], sizes = [16, 16], strides = [1, 1]} : vector<20x16xf32> to vector<16x16xf32>
    %71 = arith.minimumf %69, %70 : vector<16x16xf32>
    %72 = arith.minimumf %68, %71 : vector<16x16xf32>
    %c0_14 = arith.constant 0 : index
    %c0_15 = arith.constant 0 : index
    %c0_16 = arith.constant 0 : index
    %73 = vector.load %arg5[%c0_14, %c0_15, %c0_16] : memref<1x16x16xf32, #tpu.memory_space<vmem>>, vector<1x16x16xf32>
    %74 = vector.shape_cast %73 : vector<1x16x16xf32> to vector<16x16xf32>
    %75 = vector.shape_cast %72 : vector<16x16xf32> to vector<1x16x16xf32>
    tpu.vector_store %arg5[%c0_14, %c0_15, %c0_16], %75 {strides = array<i32>} : memref<1x16x16xf32, #tpu.memory_space<vmem>>, vector<1x16x16xf32>,
    return
  }
  func.func @transform_0(%arg0: i32, %arg1: i32) -> (i32, i32, i32) {
    %c2_i32 = arith.constant 2 : i32
    %0 = arith.muli %arg1, %c2_i32 : i32
    %c1_i32 = arith.constant 1 : i32
    %1 = arith.subi %0, %c1_i32 : i32
    %c0_i32 = arith.constant 0 : i32
    %2 = arith.maxsi %1, %c0_i32 : i32
    %c0_i32_0 = arith.constant 0 : i32
    %c0_i32_1 = arith.constant 0 : i32
    return %arg0, %2, %c0_i32_0 : i32, i32, i32
  }
  func.func @transform_1(%arg0: i32, %arg1: i32) -> (i32, i32, i32) {
    %c0_i32 = arith.constant 0 : i32
    %c0_i32_0 = arith.constant 0 : i32
    return %arg0, %arg1, %c0_i32 : i32, i32, i32
  }
  func.func @transform_2(%arg0: i32, %arg1: i32) -> (i32, i32, i32) {
    %c1_i32 = arith.constant 1 : i32
    %0 = arith.addi %arg1, %c1_i32 : i32
    %c2_i32 = arith.constant 2 : i32
    %1 = arith.muli %0, %c2_i32 : i32
    %c1_i32_0 = arith.constant 1 : i32
    %2 = arith.minsi %1, %c1_i32_0 : i32
    %c0_i32 = arith.constant 0 : i32
    %c0_i32_1 = arith.constant 0 : i32
    return %arg0, %2, %c0_i32 : i32, i32, i32
  }
  func.func @transform_3(%arg0: i32, %arg1: i32) -> (i32, i32, i32) {
    %c0_i32 = arith.constant 0 : i32
    %c0_i32_0 = arith.constant 0 : i32
    return %arg0, %arg1, %c0_i32 : i32, i32, i32
  }
}

</mosaic_0001>

<llo_original>
// kernel: segmentation_wrapper_forward.2
$region0: #{segmentation_wrapper_forward.2}
  #allocation0 [shape = 'u32[]', space=smem, size = 0x4, offset = 0x4, fixed_abs, tag = 'smem constant byte address 0x4 - core index']
  #allocation1 [shape = 'u32[144,128]{1,0:T(1,128)}', space=vmem, size = 0x12000, scoped, tag = 'internal scratch']
  %s0 = inlined_call_operand.vmem [shape: f32[4,3,256], index: 0, kind: input, shape index: {}]
  %s1 = inlined_call_operand.vmem [shape: f32[20,3], index: 1, kind: input, shape index: {}]
  %s2 = inlined_call_operand.vmem [shape: f32[20,1], index: 2, kind: input, shape index: {}]
  %s3 = inlined_call_operand.vmem [shape: f32[4,1,256], index: 3, kind: output, shape index: {}]
  %s4 = sld [smem:[#allocation0]]
  $region45: #{segmentation_wrapper_forward.2} parent=0
    _
  %s6 = ssub.s32 1, %s4
  %s7 = scalar_select 0, %s6, %s4
  loop: start=0, step=1, limit=6
  $region2: #{segmentation_wrapper_forward.2} parent=0 // loop_pre_header
    _
  $region3: #{segmentation_wrapper_forward.2} parent=0 // loop_header
    %s9 = sphi 0, %s13
    %p10 = scmp.ge.s32.totalorder %s9, 6
    %s16 = sphi 0, %s28
    %s17 = sphi 0, %s24
    %s18 = sphi 0, %s16
    %s19 = sphi 0, %s17
    %s20 = sphi 0, %s18
    %s21 = sphi 0, %s19
    %s33 = sphi 0, %s35
    %s36 = sphi 0, %s33
    %s37 = sphi 0, %s36
    %s53 = sphi 0, %s37
    %s57 = sphi 0, %s57
    %s59 = sphi 0, %s57
    %s60 = sphi 0, %s59
    %s74 = sphi 0, %s60
    %s78 = sphi 0, %s78
    %s80 = sphi 0, %s78
    %s81 = sphi 0, %s80
    %s95 = sphi 0, %s81
    %s103 = sphi 0, %s105
    %s106 = sphi 0, %s103
    %s107 = sphi 0, %s106
    %s123 = sphi 0, %s107
  $region4: #{segmentation_wrapper_forward.2} parent=0 // loop_header_branch
    %12 = sbr.rel (%p10) target = $region8
  $region5: #{segmentation_wrapper_forward.2} parent=0 // loop_body
    %s14 = ssub.s32 %s9, 1
    %s15 = ssub.s32 %s9, 2
    %s22 = sadd.s32 1, %s17
    %p23 = scmp.ge.s32.totalorder %s22, 1
    %s24 = scalar_select %p23, 0, %s22
    %s25 = sadd.s32 1, %s16
    %s26 = scalar_select %p23, %s25, %s16
    %p27 = scmp.ge.s32.totalorder %s26, 4
    %s28 = scalar_select %p27, 0, %s26
    %s29 = ssub.s32 %s16, %s28
    %s30 = ssub.s32 %s17, %s24
    %s31 = sor.u32 %s29, %s30
    %p32 = scmp.eq.s32.totalorder %s31, 0
    %s34 = sadd.s32 %s33, 1
    %s35 = scalar_select %p32, %s33, %s34
    %p38 = pneg %p32
    %p39 = scmp.eq.s32.totalorder %s9, 3
    %p40 = por %p38, %p39
    %p41 = scmp.ne.s32.totalorder %s33, %s36
    %p42 = scmp.eq.s32.totalorder %s9, 0
    %p43 = por %p41, %p42
    %p44 = scmp.ne.s32.totalorder %s33, %s36
    %p45 = scmp.eq.s32.totalorder %s14, 3
    %p46 = por %p44, %p45
    %p47 = scmp.ne.s32.totalorder %s36, %s37
    %p48 = scmp.eq.s32.totalorder %s14, 0
    %p49 = por %p47, %p48
    %p50 = scmp.ne.s32.totalorder %s36, %s37
    %p51 = scmp.eq.s32.totalorder %s15, 3
    %p52 = por %p50, %p51
    %p54 = scmp.ne.s32.totalorder %s37, %s53
    %p55 = scmp.eq.s32.totalorder %s15, 0
    %p56 = por %p54, %p55
    %s58 = sadd.s32 %s57, 1
    %p61 = scmp.eq.s32.totalorder %s9, 3
    %p62 = scmp.ne.s32.totalorder %s57, %s59
    %p63 = scmp.eq.s32.totalorder %s9, 0
    %p64 = por %p62, %p63
    %p65 = scmp.ne.s32.totalorder %s57, %s59
    %p66 = scmp.eq.s32.totalorder %s14, 3
    %p67 = por %p65, %p66
    %p68 = scmp.ne.s32.totalorder %s59, %s60
    %p69 = scmp.eq.s32.totalorder %s14, 0
    %p70 = por %p68, %p69
    %p71 = scmp.ne.s32.totalorder %s59, %s60
    %p72 = scmp.eq.s32.totalorder %s15, 3
    %p73 = por %p71, %p72
    %p75 = scmp.ne.s32.totalorder %s60, %s74
    %p76 = scmp.eq.s32.totalorder %s15, 0
    %p77 = por %p75, %p76
    %s79 = sadd.s32 %s78, 1
    %p82 = scmp.eq.s32.totalorder %s9, 3
    %p83 = scmp.ne.s32.totalorder %s78, %s80
    %p84 = scmp.eq.s32.totalorder %s9, 0
    %p85 = por %p83, %p84
    %p86 = scmp.ne.s32.totalorder %s78, %s80
    %p87 = scmp.eq.s32.totalorder %s14, 3
    %p88 = por %p86, %p87
    %p89 = scmp.ne.s32.totalorder %s80, %s81
    %p90 = scmp.eq.s32.totalorder %s14, 0
    %p91 = por %p89, %p90
    %p92 = scmp.ne.s32.totalorder %s80, %s81
    %p93 = scmp.eq.s32.totalorder %s15, 3
    %p94 = por %p92, %p93
    %p96 = scmp.ne.s32.totalorder %s81, %s95
    %p97 = scmp.eq.s32.totalorder %s15, 0
    %p98 = por %p96, %p97
    %s99 = ssub.s32 %s16, %s28
    %s100 = ssub.s32 %s17, %s24
    %s101 = sor.u32 %s99, %s100
    %p102 = scmp.eq.s32.totalorder %s101, 0
    %s104 = sadd.s32 %s103, 1
    %s105 = scalar_select %p102, %s103, %s104
    %p108 = pneg %p102
    %p109 = scmp.eq.s32.totalorder %s9, 3
    %p110 = por %p108, %p109
    %p111 = scmp.ne.s32.totalorder %s103, %s106
    %p112 = scmp.eq.s32.totalorder %s9, 0
    %p113 = por %p111, %p112
    %p114 = scmp.ne.s32.totalorder %s103, %s106
    %p115 = scmp.eq.s32.totalorder %s14, 3
    %p116 = por %p114, %p115
    %p117 = scmp.ne.s32.totalorder %s106, %s107
    %p118 = scmp.eq.s32.totalorder %s14, 0
    %p119 = por %p117, %p118
    %p120 = scmp.ne.s32.totalorder %s106, %s107
    %p121 = scmp.eq.s32.totalorder %s15, 3
    %p122 = por %p120, %p121
    %p124 = scmp.ne.s32.totalorder %s107, %s123
    %p125 = scmp.eq.s32.totalorder %s15, 0
    %p126 = por %p124, %p125
    %p127 = scmp.le.s32.totalorder 1, %s9
    %p128 = scmp.lt.s32.totalorder %s9, 5
    %p129 = pnand %p127, %p128
    %p130 = pneg %p129
    // Predicated region
    $region9: #{segmentation_wrapper_forward.2} parent=5 // pred_check
      _
    $region10: #{segmentation_wrapper_forward.2} parent=5 // pred_check_branch
      %132 = sbr.rel (%p129) target = $region12
    $region11: #{segmentation_wrapper_forward.2} parent=5 // pred_region
      %s133 = ssub.s32 %s9, 1
      // Predicated region
      $region13: #{segmentation_wrapper_forward.2} parent=11 // pred_check
        %p134 = pneg %p70
      $region14: #{segmentation_wrapper_forward.2} parent=11 // pred_check_branch
        %136 = sbr.rel (%p134) target = $region16
      $region15: #{segmentation_wrapper_forward.2} parent=11 // pred_region
        _
      $region16: #{segmentation_wrapper_forward.2} parent=11 // pred_fallthru
        _
      // Predicated region
      $region17: #{segmentation_wrapper_forward.2} parent=11 // pred_check
        %p137 = pneg %p91
      $region18: #{segmentation_wrapper_forward.2} parent=11 // pred_check_branch
        %139 = sbr.rel (%p137) target = $region20
      $region19: #{segmentation_wrapper_forward.2} parent=11 // pred_region
        _
      $region20: #{segmentation_wrapper_forward.2} parent=11 // pred_fallthru
        _
    $region12: #{segmentation_wrapper_forward.2} parent=5 // pred_fallthru
      _
    %p140 = scmp.lt.s32.totalorder %s9, 4
    // Predicated region
    $region21: #{segmentation_wrapper_forward.2} parent=5 // pred_check
      %p141 = pneg %p140
    $region22: #{segmentation_wrapper_forward.2} parent=5 // pred_check_branch
      %143 = sbr.rel (%p141) target = $region24
    $region23: #{segmentation_wrapper_forward.2} parent=5 // pred_region
      // Predicated region
      $region25: #{segmentation_wrapper_forward.2} parent=23 // pred_check
        %p144 = pneg %p43
      $region26: #{segmentation_wrapper_forward.2} parent=23 // pred_check_branch
        %146 = sbr.rel (%p144) target = $region28
      $region27: #{segmentation_wrapper_forward.2} parent=23 // pred_region
        %s147 = smul.u32 2, %s17
        %p148 = scmp.lt.s32.totalorder %s16, 3
        %s149 = scalar_select %p148, %s16, 3
        %p150 = scmp.lt.s32.totalorder %s147, 1
        %s151 = scalar_select %p150, %s147, 1
        %s152 = smul.addr %s149, 2
        %s153 = sadd.s32 %s151, %s152
        %s154 = smul.addr %s153, 4
        %s155 = scalar_lea.vmem %s0, %s154
        %s156 = smul.u32 2, %s17
      $region28: #{segmentation_wrapper_forward.2} parent=23 // pred_fallthru
        _
    $region24: #{segmentation_wrapper_forward.2} parent=5 // pred_fallthru
      _
    %p157 = scmp.le.s32.totalorder 1, %s9
    %p158 = scmp.lt.s32.totalorder %s9, 5
    %p159 = pnand %p157, %p158
    %p160 = pneg %p159
    // Predicated region
    $region29: #{segmentation_wrapper_forward.2} parent=5 // pred_check
      _
    $region30: #{segmentation_wrapper_forward.2} parent=5 // pred_check_branch
      %162 = sbr.rel (%p159) target = $region32
    $region31: #{segmentation_wrapper_forward.2} parent=5 // pred_region
      %s163 = ssub.s32 %s9, 1
      %s164 = smul.u32 2, %s19
      %p165 = scmp.lt.s32.totalorder %s18, 3
      %s166 = scalar_select %p165, %s18, 3
      %p167 = scmp.lt.s32.totalorder %s164, 1
      %s168 = scalar_select %p167, %s164, 1
      %s169 = smul.addr %s166, 2
      %s170 = sadd.s32 %s168, %s169
      %s171 = smul.addr %s170, 4
      %s172 = scalar_lea.vmem %s0, %s171
      %p173 = pneg %p49
      %p174 = pneg %p46
      %p175 = pneg %p70
      %p176 = pneg %p67
      %p177 = pneg %p91
      %p178 = pneg %p88
      %p179 = pneg %p119
      %p180 = pneg %p116
      %s181 = smul.u32 2, %s19
      %p182 = scmp.lt.s32.totalorder %s18, 3
      %s183 = scalar_select %p182, %s18, 3
      %p184 = scmp.lt.s32.totalorder %s181, 1
      %s185 = scalar_select %p184, %s181, 1
      %s186 = smul.addr %s183, 2
      %s187 = sadd.s32 %s185, %s186
      %s188 = scalar_lea.vmem %s3, %s187
      %s189 = smul.u32 2, %s19
      %p190 = scmp.lt.s32.totalorder %s18, 3
      %s191 = scalar_select %p190, %s18, 3
      %p192 = scmp.lt.s32.totalorder %s189, 1
      %s193 = scalar_select %p192, %s189, 1
      %s194 = smul.addr %s191, 2
      %s195 = sadd.s32 %s193, %s194
      %s196 = smul.addr %s195, 4
      %s197 = scalar_lea.vmem %s0, %s196
      %s198 = smul.u32 2, %s19
      %s199 = smul.u32 2, %s19
      %p200 = scmp.lt.s32.totalorder %s18, 3
      %s201 = scalar_select %p200, %s18, 3
      %p202 = scmp.lt.s32.totalorder %s199, 1
      %s203 = scalar_select %p202, %s199, 1
      %s204 = smul.addr %s201, 2
      %s205 = sadd.s32 %s203, %s204
      %s206 = scalar_lea.vmem %s3, %s205
      %s207 = smul.u32 2, %s19
      %v208 = vld [vmem:[%s197] sm:$0x77]
      %v209 = vld [vmem:[%s1] sm:$0xff]
      %v210 = vld [vmem:[%s1 + $0x8] sm:$0xff]
      %v211 = vld [vmem:[%s1 + $0x10] sm:$0xf]
      %v212 = vld [vmem:[%s2] sm:$0xff]
      %v213 = vld [vmem:[%s2 + $0x8] sm:$0xff]
      %v214 = vld [vmem:[%s2 + $0x10] sm:$0xf]
      %216 = vset.pattern.permute.xlu0 0
      %217 = vperm.xlu0 %216, %v209
      %v218 = vpop.permute.xlu0 %217
      %221 = vset.pattern.permute.xlu0 0
      %222 = vperm.xlu0 %221, %v210
      %v223 = vpop.permute.xlu0 %222
      %226 = vset.pattern.permute.xlu0 0
      %227 = vperm.xlu0 %226, %v211
      %v228 = vpop.permute.xlu0 %227
      %v231 = vlaneseq
      %v232 = vshrl.u32 %v231, 7
      %v233 = vsub.s32 0, %v232
      %v234 = vrot.slane %v208, %v233
      %v235 = vlaneseq
      %v236 = vshrl.u32 %v235, 7
      %v237 = vsub.s32 4, %v236
      %v238 = vrot.slane %v208, %v237
      %v241 = vlaneseq
      %v242 = vshrl.u32 %v241, 7
      %v243 = vsub.s32 0, %v242
      %v244 = vrot.slane %v234, %v243
      %v245 = vlaneseq
      %v246 = vshrl.u32 %v245, 7
      %v247 = vsub.s32 0, %v246
      %v248 = vrot.slane %v238, %v247
      %v249 = vmul.f32 %v218, %v244
      %v250 = vmul.f32 %v218, %v248
      %v251 = vmul.f32 %v223, %v244
      %v252 = vmul.f32 %v223, %v248
      %v253 = vmul.f32 %v228, %v244
      %v254 = vmul.f32 %v228, %v248
      %256 = vset.pattern.permute.xlu0 0
      %257 = vperm.xlu0 %256, %v212
      %v258 = vpop.permute.xlu0 %257
      %261 = vset.pattern.permute.xlu0 0
      %262 = vperm.xlu0 %261, %v213
      %v263 = vpop.permute.xlu0 %262
      %266 = vset.pattern.permute.xlu0 0
      %267 = vperm.xlu0 %266, %v214
      %v268 = vpop.permute.xlu0 %267
      %v270 = vadd.f32 %v258, %v249
      %v271 = vadd.f32 %v258, %v250
      %v272 = vadd.f32 %v263, %v251
      %v273 = vadd.f32 %v263, %v252
      %v274 = vadd.f32 %v268, %v253
      %v275 = vadd.f32 %v268, %v254
      %276 = vset.pattern.permute.xlu0 1
      %277 = vperm.xlu0 %276, %v209
      %v278 = vpop.permute.xlu0 %277
      %280 = vset.pattern.permute.xlu0 1
      %281 = vperm.xlu0 %280, %v210
      %v282 = vpop.permute.xlu0 %281
      %284 = vset.pattern.permute.xlu0 1
      %285 = vperm.xlu0 %284, %v211
      %v286 = vpop.permute.xlu0 %285
      %v288 = vlaneseq
      %v289 = vshrl.u32 %v288, 7
      %v290 = vsub.s32 1, %v289
      %v291 = vrot.slane %v208, %v290
      %v292 = vlaneseq
      %v293 = vshrl.u32 %v292, 7
      %v294 = vsub.s32 5, %v293
      %v295 = vrot.slane %v208, %v294
      %v298 = vlaneseq
      %v299 = vshrl.u32 %v298, 7
      %v300 = vsub.s32 1, %v299
      %v301 = vrot.slane %v291, %v300
      %v302 = vlaneseq
      %v303 = vshrl.u32 %v302, 7
      %v304 = vsub.s32 1, %v303
      %v305 = vrot.slane %v295, %v304
      %v306 = vmul.f32 %v278, %v301
      %v307 = vmul.f32 %v278, %v305
      %v308 = vmul.f32 %v282, %v301
      %v309 = vmul.f32 %v282, %v305
      %v310 = vmul.f32 %v286, %v301
      %v311 = vmul.f32 %v286, %v305
      %v312 = vadd.f32 %v270, %v306
      %v313 = vadd.f32 %v271, %v307
      %v314 = vadd.f32 %v272, %v308
      %v315 = vadd.f32 %v273, %v309
      %v316 = vadd.f32 %v274, %v310
      %v317 = vadd.f32 %v275, %v311
      %318 = vset.pattern.permute.xlu0 2
      %319 = vperm.xlu0 %318, %v209
      %v320 = vpop.permute.xlu0 %319
      %322 = vset.pattern.permute.xlu0 2
      %323 = vperm.xlu0 %322, %v210
      %v324 = vpop.permute.xlu0 %323
      %326 = vset.pattern.permute.xlu0 2
      %327 = vperm.xlu0 %326, %v211
      %v328 = vpop.permute.xlu0 %327
      %v330 = vlaneseq
      %v331 = vshrl.u32 %v330, 7
      %v332 = vsub.s32 2, %v331
      %v333 = vrot.slane %v208, %v332
      %v334 = vlaneseq
      %v335 = vshrl.u32 %v334, 7
      %v336 = vsub.s32 6, %v335
      %v337 = vrot.slane %v208, %v336
      %v340 = vlaneseq
      %v341 = vshrl.u32 %v340, 7
      %v342 = vsub.s32 2, %v341
      %v343 = vrot.slane %v333, %v342
      %v344 = vlaneseq
      %v345 = vshrl.u32 %v344, 7
      %v346 = vsub.s32 2, %v345
      %v347 = vrot.slane %v337, %v346
      %v348 = vmul.f32 %v320, %v343
      %v349 = vmul.f32 %v320, %v347
      %v350 = vmul.f32 %v324, %v343
      %v351 = vmul.f32 %v324, %v347
      %v352 = vmul.f32 %v328, %v343
      %v353 = vmul.f32 %v328, %v347
      %v354 = vadd.f32 %v312, %v348
      %v355 = vadd.f32 %v313, %v349
      %v356 = vadd.f32 %v314, %v350
      %v357 = vadd.f32 %v315, %v351
      %v358 = vadd.f32 %v316, %v352
      %v359 = vadd.f32 %v317, %v353
      %vm360 = vcmask 1043456
      %v361 = vsel %vm360, %v358, -inf
      %v362 = vmax.f32 %v354, %v361
      %v363 = vmax.f32 %v362, %v356
      %v364 = vrot.slane %v363, 4
      %v365 = vmax.f32 %v363, %v364
      %v366 = vrot.slane %v365, 2
      %v367 = vmax.f32 %v365, %v366
      %v368 = vrot.slane %v367, 1
      %v369 = vmax.f32 %v367, %v368
      %v370 = vsel %vm360, %v359, -inf
      %v371 = vmax.f32 %v355, %v370
      %v372 = vmax.f32 %v371, %v357
      %v373 = vrot.slane %v372, 4
      %v374 = vmax.f32 %v372, %v373
      %v375 = vrot.slane %v374, 2
      %v376 = vmax.f32 %v374, %v375
      %v377 = vrot.slane %v376, 1
      %v378 = vmax.f32 %v376, %v377
      %v379 = vsub.f32 %v354, %v369
      %v380 = vsub.f32 %v355, %v378
      %v381 = vsub.f32 %v356, %v369
      %v382 = vsub.f32 %v357, %v378
      %v383 = vsub.f32 %v358, %v369
      %v384 = vsub.f32 %v359, %v378
      %v385 = vmul.f32 %v379, 1.442695
      %v386 = vpow.pop %v385
      %v387 = vmul.f32 %v380, 1.442695
      %v388 = vpow.pop %v387
      %v389 = vmul.f32 %v381, 1.442695
      %v390 = vpow.pop %v389
      %v391 = vmul.f32 %v382, 1.442695
      %v392 = vpow.pop %v391
      %v393 = vmul.f32 %v383, 1.442695
      %v394 = vpow.pop %v393
      %v395 = vmul.f32 %v384, 1.442695
      %v396 = vpow.pop %v395
      %v397 = vadd.f32 %v386, %v390
      %v398 = vsel %vm360, %v394, 0.0
      %v399 = vadd.f32 %v397, %v398
      %v400 = vrot.slane %v399, 4
      %v401 = vadd.f32 %v399, %v400
      %v402 = vrot.slane %v401, 2
      %v403 = vadd.f32 %v401, %v402
      %v404 = vrot.slane %v403, 1
      %v405 = vadd.f32 %v403, %v404
      %v406 = vadd.f32 %v388, %v392
      %v407 = vsel %vm360, %v396, 0.0
      %v408 = vadd.f32 %v406, %v407
      %v409 = vrot.slane %v408, 4
      %v410 = vadd.f32 %v408, %v409
      %v411 = vrot.slane %v410, 2
      %v412 = vadd.f32 %v410, %v411
      %v413 = vrot.slane %v412, 1
      %v414 = vadd.f32 %v412, %v413
      %v415 = vrcp.pop %v405
      %v416 = vrcp.pop %v414
      %v417 = vmul.f32 %v405, %v415
      %v418 = vmul.f32 %v414, %v416
      %v419 = vsub.f32 2.0, %v417
      %v420 = vsub.f32 2.0, %v418
      %v421 = vmul.f32 %v415, %v419
      %v422 = vmul.f32 %v416, %v420
      %v423 = vsub.f32 %v405, %v386
      %v424 = vsub.f32 %v414, %v388
      %v425 = vmul.f32 %v423, %v421
      %v426 = vmul.f32 %v424, %v422
      %v429 = vcombine.low %v425, %v426
      %v431 = vunpack.c.l.s4 1966171168
      %v432 = vunpack.c.0.s8 %v431
      %v433 = vlaneseq
      %v434 = vshrl.u32 %v433, 7
      %v435 = vsub.s32 %v432, %v434
      %v436 = vrot.slane %v429, %v435
      %v438 = vunpack.c.l.s4 1966171168
      %v439 = vunpack.c.0.s8 %v438
      %v440 = vlaneseq
      %v441 = vshrl.u32 %v440, 7
      %v442 = vsub.s32 %v439, %v441
      %v443 = vrot.slane %v436, %v442
      %v445 = vlaneseq
      %vm446 = vcmp.ge.s32.totalorder %v445, 0
      %vm447 = vcmp.lt.s32.totalorder %v445, 256
      %vm448 = vmand %vm446, %vm447
      %449 = vst.msk [vmem:[%s206] sm:$0x3] %vm448, %v443
      %s450 = smul.u32 2, %s19
      %p451 = scmp.lt.s32.totalorder %s18, 3
      %s452 = scalar_select %p451, %s18, 3
      %p453 = scmp.lt.s32.totalorder %s450, 1
      %s454 = scalar_select %p453, %s450, 1
      %s455 = smul.addr %s452, 2
      %s456 = sadd.s32 %s454, %s455
      %s457 = scalar_lea.vmem %s3, %s456
      // Predicated region
      $region33: #{segmentation_wrapper_forward.2} parent=31 // pred_check
        %p458 = pneg %p116
      $region34: #{segmentation_wrapper_forward.2} parent=31 // pred_check_branch
        %460 = sbr.rel (%p458) target = $region36
      $region35: #{segmentation_wrapper_forward.2} parent=31 // pred_region
        %s461 = smul.u32 2, %s19
      $region36: #{segmentation_wrapper_forward.2} parent=31 // pred_fallthru
        _
    $region32: #{segmentation_wrapper_forward.2} parent=5 // pred_fallthru
      _
    %p462 = scmp.le.s32.totalorder 2, %s9
    // Predicated region
    $region37: #{segmentation_wrapper_forward.2} parent=5 // pred_check
      %p463 = pneg %p462
    $region38: #{segmentation_wrapper_forward.2} parent=5 // pred_check_branch
      %465 = sbr.rel (%p463) target = $region40
    $region39: #{segmentation_wrapper_forward.2} parent=5 // pred_region
      %s466 = ssub.s32 %s9, 2
      // Predicated region
      $region41: #{segmentation_wrapper_forward.2} parent=39 // pred_check
        %p467 = pneg %p122
      $region42: #{segmentation_wrapper_forward.2} parent=39 // pred_check_branch
        %469 = sbr.rel (%p467) target = $region44
      $region43: #{segmentation_wrapper_forward.2} parent=39 // pred_region
        %s470 = smul.u32 2, %s21
        %p471 = scmp.lt.s32.totalorder %s20, 3
        %s472 = scalar_select %p471, %s20, 3
        %p473 = scmp.lt.s32.totalorder %s470, 1
        %s474 = scalar_select %p473, %s470, 1
        %s475 = smul.addr %s472, 2
        %s476 = sadd.s32 %s474, %s475
        %s477 = scalar_lea.vmem %s3, %s476
      $region44: #{segmentation_wrapper_forward.2} parent=39 // pred_fallthru
        _
    $region40: #{segmentation_wrapper_forward.2} parent=5 // pred_fallthru
      _
  $region6: #{segmentation_wrapper_forward.2} parent=0 // loop_footer
    %s13 = sadd.s32 1, %s9
  $region7: #{segmentation_wrapper_forward.2} parent=0 // loop_footer_branch
    %8 = sbr.rel target = $region3
  $region8: #{segmentation_wrapper_forward.2} parent=0 // loop_exit
    _

// kernel: segmentation_wrapper_forward.3
$region0: #{segmentation_wrapper_forward.3}
  #allocation0 [shape = 'u32[]', space=smem, size = 0x4, offset = 0x4, fixed_abs, tag = 'smem constant byte address 0x4 - core index']
  #allocation1 [shape = 'u32[144,128]{1,0:T(1,128)}', space=vmem, size = 0x12000, scoped, tag = 'internal scratch']
  %s0 = inlined_call_operand.vmem [shape: f32[4,16,16], index: 0, kind: input, shape index: {}, may-alias: {0,1,2}]
  %s1 = inlined_call_operand.vmem [shape: f32[4,16,16], index: 1, kind: input, shape index: {}, may-alias: {0,1,2}]
  %s2 = inlined_call_operand.vmem [shape: f32[4,16,16], index: 2, kind: input, shape index: {}, may-alias: {0,1,2}]
  %s3 = inlined_call_operand.hbm [shape: f32[4,16,16], index: 3, kind: output, shape index: {}]
  %s4 = sld [smem:[#allocation0]]
  $region45: #{segmentation_wrapper_forward.3} parent=0
    _
  %s6 = ssub.s32 1, %s4
  %s7 = scalar_select 0, %s6, %s4
  $region1: #{segmentation_wrapper_forward.3} parent=0
    #allocation2 [shape = 'u8[16384]{0}', space=vmem, size = 0x4000, scoped, tag = 'output window, operand 0']
    #allocation3 [shape = 's32[2]{0}', space=sflag, size = 0x8, scoped, tag = 'scoped memory for segmentation_wrapper_forward.3']
    %8 = vsyncpa [#allocation3], 0
    %s9 = scalar_lea.sflag [#allocation3], 1
    %10 = vsyncpa %s9, 0
    loop: start=0, step=1, limit=6
    $region2: #{segmentation_wrapper_forward.3} parent=1 // loop_pre_header
      _
    $region3: #{segmentation_wrapper_forward.3} parent=1 // loop_header
      %s12 = sphi 0, %s16
      %p13 = scmp.ge.s32.totalorder %s12, 6
      %s19 = sphi 0, %s31
      %s20 = sphi 0, %s27
      %s21 = sphi 0, %s19
      %s22 = sphi 0, %s20
      %s23 = sphi 0, %s21
      %s24 = sphi 0, %s22
      %s44 = sphi 0, %s46
      %s47 = sphi 0, %s44
      %s48 = sphi 0, %s47
      %s64 = sphi 0, %s48
      %s72 = sphi 0, %s74
      %s75 = sphi 0, %s72
      %s76 = sphi 0, %s75
      %s92 = sphi 0, %s76
      %s108 = sphi 0, %s110
      %s111 = sphi 0, %s108
      %s112 = sphi 0, %s111
      %s128 = sphi 0, %s112
      %s136 = sphi 0, %s138
      %s139 = sphi 0, %s136
      %s140 = sphi 0, %s139
      %s156 = sphi 0, %s140
    $region4: #{segmentation_wrapper_forward.3} parent=1 // loop_header_branch
      %15 = sbr.rel (%p13) target = $region8
    $region5: #{segmentation_wrapper_forward.3} parent=1 // loop_body
      %s17 = ssub.s32 %s12, 1
      %s18 = ssub.s32 %s12, 2
      %s25 = sadd.s32 1, %s20
      %p26 = scmp.ge.s32.totalorder %s25, 1
      %s27 = scalar_select %p26, 0, %s25
      %s28 = sadd.s32 1, %s19
      %s29 = scalar_select %p26, %s28, %s19
      %p30 = scmp.ge.s32.totalorder %s29, 4
      %s31 = scalar_select %p30, 0, %s29
      %s32 = smul.u32 %s20, 2
      %s33 = ssub.s32 %s32, 1
      %p34 = scmp.gt.s32.totalorder %s33, 0
      %s35 = scalar_select %p34, %s33, 0
      %s36 = smul.u32 %s27, 2
      %s37 = ssub.s32 %s36, 1
      %p38 = scmp.gt.s32.totalorder %s37, 0
      %s39 = scalar_select %p38, %s37, 0
      %s40 = ssub.s32 %s19, %s31
      %s41 = ssub.s32 %s35, %s39
      %s42 = sor.u32 %s40, %s41
      %p43 = scmp.eq.s32.totalorder %s42, 0
      %s45 = sadd.s32 %s44, 1
      %s46 = scalar_select %p43, %s44, %s45
      %p49 = pneg %p43
      %p50 = scmp.eq.s32.totalorder %s12, 3
      %p51 = por %p49, %p50
      %p52 = scmp.ne.s32.totalorder %s44, %s47
      %p53 = scmp.eq.s32.totalorder %s12, 0
      %p54 = por %p52, %p53
      %p55 = scmp.ne.s32.totalorder %s44, %s47
      %p56 = scmp.eq.s32.totalorder %s17, 3
      %p57 = por %p55, %p56
      %p58 = scmp.ne.s32.totalorder %s47, %s48
      %p59 = scmp.eq.s32.totalorder %s17, 0
      %p60 = por %p58, %p59
      %p61 = scmp.ne.s32.totalorder %s47, %s48
      %p62 = scmp.eq.s32.totalorder %s18, 3
      %p63 = por %p61, %p62
      %p65 = scmp.ne.s32.totalorder %s48, %s64
      %p66 = scmp.eq.s32.totalorder %s18, 0
      %p67 = por %p65, %p66
      %s68 = ssub.s32 %s19, %s31
      %s69 = ssub.s32 %s20, %s27
      %s70 = sor.u32 %s68, %s69
      %p71 = scmp.eq.s32.totalorder %s70, 0
      %s73 = sadd.s32 %s72, 1
      %s74 = scalar_select %p71, %s72, %s73
      %p77 = pneg %p71
      %p78 = scmp.eq.s32.totalorder %s12, 3
      %p79 = por %p77, %p78
      %p80 = scmp.ne.s32.totalorder %s72, %s75
      %p81 = scmp.eq.s32.totalorder %s12, 0
      %p82 = por %p80, %p81
      %p83 = scmp.ne.s32.totalorder %s72, %s75
      %p84 = scmp.eq.s32.totalorder %s17, 3
      %p85 = por %p83, %p84
      %p86 = scmp.ne.s32.totalorder %s75, %s76
      %p87 = scmp.eq.s32.totalorder %s17, 0
      %p88 = por %p86, %p87
      %p89 = scmp.ne.s32.totalorder %s75, %s76
      %p90 = scmp.eq.s32.totalorder %s18, 3
      %p91 = por %p89, %p90
      %p93 = scmp.ne.s32.totalorder %s76, %s92
      %p94 = scmp.eq.s32.totalorder %s18, 0
      %p95 = por %p93, %p94
      %s96 = sadd.s32 %s20, 1
      %s97 = smul.u32 %s96, 2
      %p98 = scmp.lt.s32.totalorder %s97, 1
      %s99 = scalar_select %p98, %s97, 1
      %s100 = sadd.s32 %s27, 1
      %s101 = smul.u32 %s100, 2
      %p102 = scmp.lt.s32.totalorder %s101, 1
      %s103 = scalar_select %p102, %s101, 1
      %s104 = ssub.s32 %s19, %s31
      %s105 = ssub.s32 %s99, %s103
      %s106 = sor.u32 %s104, %s105
      %p107 = scmp.eq.s32.totalorder %s106, 0
      %s109 = sadd.s32 %s108, 1
      %s110 = scalar_select %p107, %s108, %s109
      %p113 = pneg %p107
      %p114 = scmp.eq.s32.totalorder %s12, 3
      %p115 = por %p113, %p114
      %p116 = scmp.ne.s32.totalorder %s108, %s111
      %p117 = scmp.eq.s32.totalorder %s12, 0
      %p118 = por %p116, %p117
      %p119 = scmp.ne.s32.totalorder %s108, %s111
      %p120 = scmp.eq.s32.totalorder %s17, 3
      %p121 = por %p119, %p120
      %p122 = scmp.ne.s32.totalorder %s111, %s112
      %p123 = scmp.eq.s32.totalorder %s17, 0
      %p124 = por %p122, %p123
      %p125 = scmp.ne.s32.totalorder %s111, %s112
      %p126 = scmp.eq.s32.totalorder %s18, 3
      %p127 = por %p125, %p126
      %p129 = scmp.ne.s32.totalorder %s112, %s128
      %p130 = scmp.eq.s32.totalorder %s18, 0
      %p131 = por %p129, %p130
      %s132 = ssub.s32 %s19, %s31
      %s133 = ssub.s32 %s20, %s27
      %s134 = sor.u32 %s132, %s133
      %p135 = scmp.eq.s32.totalorder %s134, 0
      %s137 = sadd.s32 %s136, 1
      %s138 = scalar_select %p135, %s136, %s137
      %p141 = pneg %p135
      %p142 = scmp.eq.s32.totalorder %s12, 3
      %p143 = por %p141, %p142
      %p144 = scmp.ne.s32.totalorder %s136, %s139
      %p145 = scmp.eq.s32.totalorder %s12, 0
      %p146 = por %p144, %p145
      %p147 = scmp.ne.s32.totalorder %s136, %s139
      %p148 = scmp.eq.s32.totalorder %s17, 3
      %p149 = por %p147, %p148
      %p150 = scmp.ne.s32.totalorder %s139, %s140
      %p151 = scmp.eq.s32.totalorder %s17, 0
      %p152 = por %p150, %p151
      %p153 = scmp.ne.s32.totalorder %s139, %s140
      %p154 = scmp.eq.s32.totalorder %s18, 3
      %p155 = por %p153, %p154
      %p157 = scmp.ne.s32.totalorder %s140, %s156
      %p158 = scmp.eq.s32.totalorder %s18, 0
      %p159 = por %p157, %p158
      %p160 = scmp.le.s32.totalorder 1, %s12
      %p161 = scmp.lt.s32.totalorder %s12, 5
      %p162 = pnand %p160, %p161
      %p163 = pneg %p162
      // Predicated region
      $region9: #{segmentation_wrapper_forward.3} parent=5 // pred_check
        _
      $region10: #{segmentation_wrapper_forward.3} parent=5 // pred_check_branch
        %165 = sbr.rel (%p162) target = $region12
      $region11: #{segmentation_wrapper_forward.3} parent=5 // pred_region
        %s166 = ssub.s32 %s12, 1
      $region12: #{segmentation_wrapper_forward.3} parent=5 // pred_fallthru
        _
      %p167 = scmp.lt.s32.totalorder %s12, 4
      // Predicated region
      $region13: #{segmentation_wrapper_forward.3} parent=5 // pred_check
        %p168 = pneg %p167
      $region14: #{segmentation_wrapper_forward.3} parent=5 // pred_check_branch
        %170 = sbr.rel (%p168) target = $region16
      $region15: #{segmentation_wrapper_forward.3} parent=5 // pred_region
        // Predicated region
        $region17: #{segmentation_wrapper_forward.3} parent=15 // pred_check
          %p171 = pneg %p54
        $region18: #{segmentation_wrapper_forward.3} parent=15 // pred_check_branch
          %173 = sbr.rel (%p171) target = $region20
        $region19: #{segmentation_wrapper_forward.3} parent=15 // pred_region
          %s174 = smul.u32 %s20, 2
          %s175 = ssub.s32 %s174, 1
          %p176 = scmp.gt.s32.totalorder %s175, 0
          %s177 = scalar_select %p176, %s175, 0
          %p178 = scmp.lt.s32.totalorder %s19, 3
          %s179 = scalar_select %p178, %s19, 3
          %p180 = scmp.lt.s32.totalorder %s177, 1
          %s181 = scalar_select %p180, %s177, 1
          %s182 = smul.addr %s179, 2
          %s183 = sadd.s32 %s181, %s182
          %s184 = smul.addr %s183, 8
          %s185 = scalar_lea.vmem %s0, %s184
          %s186 = smul.u32 %s20, 2
          %s187 = ssub.s32 %s186, 1
          %p188 = scmp.gt.s32.totalorder %s187, 0
          %s189 = scalar_select %p188, %s187, 0
        $region20: #{segmentation_wrapper_forward.3} parent=15 // pred_fallthru
          _
        // Predicated region
        $region21: #{segmentation_wrapper_forward.3} parent=15 // pred_check
          %p190 = pneg %p82
        $region22: #{segmentation_wrapper_forward.3} parent=15 // pred_check_branch
          %192 = sbr.rel (%p190) target = $region24
        $region23: #{segmentation_wrapper_forward.3} parent=15 // pred_region
          %s193 = smul.u32 2, %s20
          %p194 = scmp.lt.s32.totalorder %s19, 3
          %s195 = scalar_select %p194, %s19, 3
          %p196 = scmp.lt.s32.totalorder %s193, 1
          %s197 = scalar_select %p196, %s193, 1
          %s198 = smul.addr %s195, 2
          %s199 = sadd.s32 %s197, %s198
          %s200 = smul.addr %s199, 8
          %s201 = scalar_lea.vmem %s1, %s200
          %s202 = smul.u32 2, %s20
        $region24: #{segmentation_wrapper_forward.3} parent=15 // pred_fallthru
          _
        // Predicated region
        $region25: #{segmentation_wrapper_forward.3} parent=15 // pred_check
          %p203 = pneg %p118
        $region26: #{segmentation_wrapper_forward.3} parent=15 // pred_check_branch
          %205 = sbr.rel (%p203) target = $region28
        $region27: #{segmentation_wrapper_forward.3} parent=15 // pred_region
          %s206 = sadd.s32 %s20, 1
          %s207 = smul.u32 %s206, 2
          %p208 = scmp.lt.s32.totalorder %s207, 1
          %s209 = scalar_select %p208, %s207, 1
          %p210 = scmp.lt.s32.totalorder %s19, 3
          %s211 = scalar_select %p210, %s19, 3
          %p212 = scmp.lt.s32.totalorder %s209, 1
          %s213 = scalar_select %p212, %s209, 1
          %s214 = smul.addr %s211, 2
          %s215 = sadd.s32 %s213, %s214
          %s216 = smul.addr %s215, 8
          %s217 = scalar_lea.vmem %s2, %s216
          %s218 = sadd.s32 %s20, 1
          %s219 = smul.u32 %s218, 2
          %p220 = scmp.lt.s32.totalorder %s219, 1
          %s221 = scalar_select %p220, %s219, 1
        $region28: #{segmentation_wrapper_forward.3} parent=15 // pred_fallthru
          _
      $region16: #{segmentation_wrapper_forward.3} parent=5 // pred_fallthru
        _
      %p222 = scmp.le.s32.totalorder 1, %s12
      %p223 = scmp.lt.s32.totalorder %s12, 5
      %p224 = pnand %p222, %p223
      %p225 = pneg %p224
      // Predicated region
      $region29: #{segmentation_wrapper_forward.3} parent=5 // pred_check
        _
      $region30: #{segmentation_wrapper_forward.3} parent=5 // pred_check_branch
        %227 = sbr.rel (%p224) target = $region32
      $region31: #{segmentation_wrapper_forward.3} parent=5 // pred_region
        %s228 = ssub.s32 %s12, 1
        %s229 = smul.u32 %s22, 2
        %s230 = ssub.s32 %s229, 1
        %p231 = scmp.gt.s32.totalorder %s230, 0
        %s232 = scalar_select %p231, %s230, 0
        %p233 = scmp.lt.s32.totalorder %s21, 3
        %s234 = scalar_select %p233, %s21, 3
        %p235 = scmp.lt.s32.totalorder %s232, 1
        %s236 = scalar_select %p235, %s232, 1
        %s237 = smul.addr %s234, 2
        %s238 = sadd.s32 %s236, %s237
        %s239 = smul.addr %s238, 8
        %s240 = scalar_lea.vmem %s0, %s239
        %p241 = pneg %p60
        %p242 = pneg %p57
        %s243 = smul.u32 2, %s22
        %p244 = scmp.lt.s32.totalorder %s21, 3
        %s245 = scalar_select %p244, %s21, 3
        %p246 = scmp.lt.s32.totalorder %s243, 1
        %s247 = scalar_select %p246, %s243, 1
        %s248 = smul.addr %s245, 2
        %s249 = sadd.s32 %s247, %s248
        %s250 = smul.addr %s249, 8
        %s251 = scalar_lea.vmem %s1, %s250
        %p252 = pneg %p88
        %p253 = pneg %p85
        %s254 = sadd.s32 %s22, 1
        %s255 = smul.u32 %s254, 2
        %p256 = scmp.lt.s32.totalorder %s255, 1
        %s257 = scalar_select %p256, %s255, 1
        %p258 = scmp.lt.s32.totalorder %s21, 3
        %s259 = scalar_select %p258, %s21, 3
        %p260 = scmp.lt.s32.totalorder %s257, 1
        %s261 = scalar_select %p260, %s257, 1
        %s262 = smul.addr %s259, 2
        %s263 = sadd.s32 %s261, %s262
        %s264 = smul.addr %s263, 8
        %s265 = scalar_lea.vmem %s2, %s264
        %p266 = pneg %p124
        %p267 = pneg %p121
        %p268 = pneg %p152
        %p269 = pneg %p149
        %s270 = sand.u32 %s139, 1
        %s271 = scalar_lea.sflag [#allocation3], %s270
        %s272 = sand.u32 %s139, 1
        %s273 = smul.addr %s272, 16
        %s274 = scalar_lea.vmem [#allocation2], %s273
        %s275 = smul.u32 %s22, 2
        %s276 = ssub.s32 %s275, 1
        %p277 = scmp.gt.s32.totalorder %s276, 0
        %s278 = scalar_select %p277, %s276, 0
        %p279 = scmp.lt.s32.totalorder %s21, 3
        %s280 = scalar_select %p279, %s21, 3
        %p281 = scmp.lt.s32.totalorder %s278, 1
        %s282 = scalar_select %p281, %s278, 1
        %s283 = smul.addr %s280, 2
        %s284 = sadd.s32 %s282, %s283
        %s285 = smul.addr %s284, 8
        %s286 = scalar_lea.vmem %s0, %s285
        %s287 = smul.u32 %s22, 2
        %s288 = ssub.s32 %s287, 1
        %p289 = scmp.gt.s32.totalorder %s288, 0
        %s290 = scalar_select %p289, %s288, 0
        %s291 = smul.u32 2, %s22
        %p292 = scmp.lt.s32.totalorder %s21, 3
        %s293 = scalar_select %p292, %s21, 3
        %p294 = scmp.lt.s32.totalorder %s291, 1
        %s295 = scalar_select %p294, %s291, 1
        %s296 = smul.addr %s293, 2
        %s297 = sadd.s32 %s295, %s296
        %s298 = smul.addr %s297, 8
        %s299 = scalar_lea.vmem %s1, %s298
        %s300 = smul.u32 2, %s22
        %s301 = sadd.s32 %s22, 1
        %s302 = smul.u32 %s301, 2
        %p303 = scmp.lt.s32.totalorder %s302, 1
        %s304 = scalar_select %p303, %s302, 1
        %p305 = scmp.lt.s32.totalorder %s21, 3
        %s306 = scalar_select %p305, %s21, 3
        %p307 = scmp.lt.s32.totalorder %s304, 1
        %s308 = scalar_select %p307, %s304, 1
        %s309 = smul.addr %s306, 2
        %s310 = sadd.s32 %s308, %s309
        %s311 = smul.addr %s310, 8
        %s312 = scalar_lea.vmem %s2, %s311
        %s313 = sadd.s32 %s22, 1
        %s314 = smul.u32 %s313, 2
        %p315 = scmp.lt.s32.totalorder %s314, 1
        %s316 = scalar_select %p315, %s314, 1
        %s317 = smul.u32 2, %s22
        %v318 = vld [vmem:[%s286] sm:$0xff]
        %v319 = vld [vmem:[%s299] sm:$0xff]
        %v320 = vld [vmem:[%s299 + $0x8] sm:$0xff]
        %v321 = vld [vmem:[%s312] sm:$0xff]
        %v323 = vrot.slane %v318, 6
        %vm327 = vcmask 1041408
        %v328 = vrot.slane %v319, 6
        %v329 = vrot.slane %v320, 6
        %v330 = vsel %vm327, %v328, %v329
        %v335 = vrot.slane %v321, 6
        %v337 = vsel %vm327, %v323, %v328
        %v338 = vsel %vm327, %v329, %v335
        %s339 = smul.u32 %s22, 16
        %s340 = ssub.s32 %s339, 2
        %v341 = vlaneseq
        %v342 = vshrl.u32 %v341, 7
        %v343 = vadd.s32 %v342, 8
        %v344 = vadd.s32 %v342, 16
        %v345 = vstv %s340
        %v346 = vadd.s32 %v345, %v342
        %v347 = vadd.s32 %v345, %v343
        %v348 = vadd.s32 %v345, %v344
        %vm349 = vcmp.ge.s32.totalorder %v346, 0
        %vm350 = vcmp.ge.s32.totalorder %v347, 0
        %vm351 = vcmp.ge.s32.totalorder %v348, 0
        %vm352 = vcmp.lt.s32.totalorder %v346, 16
        %vm353 = vcmp.lt.s32.totalorder %v347, 16
        %vm354 = vcmp.lt.s32.totalorder %v348, 16
        %vm355 = vmand %vm349, %vm352
        %vm356 = vmand %vm350, %vm353
        %vm357 = vmand %vm351, %vm354
        %v358 = vsel %vm355, 1, 0
        %v359 = vsel %vm356, 1, 0
        %v360 = vsel %vm357, 1, 0
        %vm361 = vcmp.eq.s32.totalorder %v358, 1
        %vm362 = vcmp.eq.s32.totalorder %v359, 1
        %vm363 = vcmp.eq.s32.totalorder %v360, 1
        %v364 = vsel %vm361, %v337, inf
        %v365 = vsel %vm362, %v330, inf
        %v366 = vsel %vm363, %v338, inf
        %v367 = vlaneseq
        %v368 = vand.u32 %v367, 127
        %372 = vrot.lane.b32.xlu0 %v364, 127
        %v373 = vpop.permute.xlu0 %372
        %374 = vrot.lane.b32.xlu0 %v365, 127
        %v375 = vpop.permute.xlu0 %374
        %376 = vrot.lane.b32.xlu0 %v366, 127
        %v377 = vpop.permute.xlu0 %376
        %381 = vrot.lane.b32.xlu0 %v364, 15
        %v382 = vpop.permute.xlu0 %381
        %383 = vrot.lane.b32.xlu0 %v365, 15
        %v384 = vpop.permute.xlu0 %383
        %385 = vrot.lane.b32.xlu0 %v366, 15
        %v386 = vpop.permute.xlu0 %385
        %vm390 = vcmask 121856
        %v391 = vsel %vm390, %v373, %v382
        %v392 = vsel %vm390, %v375, %v384
        %v393 = vsel %vm390, %v377, %v386
        %vm394 = vcmp.lt.s32.totalorder %v368, 15
        %v395 = vsel %vm394, 1, 0
        %vm396 = vcmp.eq.s32.totalorder %v395, 1
        %v397 = vsel %vm396, %v391, inf
        %v398 = vsel %vm396, %v392, inf
        %v399 = vsel %vm396, %v393, inf
        %400 = vrot.lane.b32.xlu0 %v364, 113
        %v401 = vpop.permute.xlu0 %400
        %402 = vrot.lane.b32.xlu0 %v365, 113
        %v403 = vpop.permute.xlu0 %402
        %404 = vrot.lane.b32.xlu0 %v366, 113
        %v405 = vpop.permute.xlu0 %404
        %409 = vrot.lane.b32.xlu0 %v364, 1
        %v410 = vpop.permute.xlu0 %409
        %411 = vrot.lane.b32.xlu0 %v365, 1
        %v412 = vpop.permute.xlu0 %411
        %413 = vrot.lane.b32.xlu0 %v366, 1
        %v414 = vpop.permute.xlu0 %413
        %vm418 = vcmask 7168
        %v419 = vsel %vm418, %v401, %v410
        %v420 = vsel %vm418, %v403, %v412
        %v421 = vsel %vm418, %v405, %v414
        %vm422 = vcmp.ge.s32.totalorder %v368, 1
        %v423 = vsel %vm422, 1, 0
        %vm424 = vcmp.eq.s32.totalorder %v423, 1
        %v425 = vsel %vm424, %v419, inf
        %v426 = vsel %vm424, %v420, inf
        %v427 = vsel %vm424, %v421, inf
        %v428 = vmin.f32 %v397, %v425
        %v429 = vmin.f32 %v398, %v426
        %v430 = vmin.f32 %v399, %v427
        %v431 = vmin.f32 %v364, %v428
        %v432 = vmin.f32 %v365, %v429
        %v433 = vmin.f32 %v366, %v430
        %434 = vrot.lane.b32.xlu0 %v364, 126
        %v435 = vpop.permute.xlu0 %434
        %436 = vrot.lane.b32.xlu0 %v365, 126
        %v437 = vpop.permute.xlu0 %436
        %438 = vrot.lane.b32.xlu0 %v366, 126
        %v439 = vpop.permute.xlu0 %438
        %443 = vrot.lane.b32.xlu0 %v364, 14
        %v444 = vpop.permute.xlu0 %443
        %445 = vrot.lane.b32.xlu0 %v365, 14
        %v446 = vpop.permute.xlu0 %445
        %447 = vrot.lane.b32.xlu0 %v366, 14
        %v448 = vpop.permute.xlu0 %447
        %vm452 = vcmask 113664
        %v453 = vsel %vm452, %v435, %v444
        %v454 = vsel %vm452, %v437, %v446
        %v455 = vsel %vm452, %v439, %v448
        %vm456 = vcmp.lt.s32.totalorder %v368, 14
        %v457 = vsel %vm456, 1, 0
        %vm458 = vcmp.eq.s32.totalorder %v457, 1
        %v459 = vsel %vm458, %v453, inf
        %v460 = vsel %vm458, %v454, inf
        %v461 = vsel %vm458, %v455, inf
        %462 = vrot.lane.b32.xlu0 %v364, 114
        %v463 = vpop.permute.xlu0 %462
        %464 = vrot.lane.b32.xlu0 %v365, 114
        %v465 = vpop.permute.xlu0 %464
        %466 = vrot.lane.b32.xlu0 %v366, 114
        %v467 = vpop.permute.xlu0 %466
        %471 = vrot.lane.b32.xlu0 %v364, 2
        %v472 = vpop.permute.xlu0 %471
        %473 = vrot.lane.b32.xlu0 %v365, 2
        %v474 = vpop.permute.xlu0 %473
        %475 = vrot.lane.b32.xlu0 %v366, 2
        %v476 = vpop.permute.xlu0 %475
        %vm480 = vcmask 15360
        %v481 = vsel %vm480, %v463, %v472
        %v482 = vsel %vm480, %v465, %v474
        %v483 = vsel %vm480, %v467, %v476
        %vm484 = vcmp.ge.s32.totalorder %v368, 2
        %v485 = vsel %vm484, 1, 0
        %vm486 = vcmp.eq.s32.totalorder %v485, 1
        %v487 = vsel %vm486, %v481, inf
        %v488 = vsel %vm486, %v482, inf
        %v489 = vsel %vm486, %v483, inf
        %v490 = vmin.f32 %v459, %v487
        %v491 = vmin.f32 %v460, %v488
        %v492 = vmin.f32 %v461, %v489
        %v493 = vmin.f32 %v431, %v490
        %v494 = vmin.f32 %v432, %v491
        %v495 = vmin.f32 %v433, %v492
        %vm499 = vcmask 1045504
        %v500 = vrot.slane %v493, 2
        %v501 = vrot.slane %v494, 2
        %v502 = vsel %vm499, %v500, %v501
        %v503 = vrot.slane %v495, 2
        %v504 = vsel %vm499, %v501, %v503
        %v508 = vmin.f32 %v493, %v502
        %v509 = vmin.f32 %v494, %v504
        %v510 = vmin.f32 %v495, %v503
        %vm514 = vcmask 1040384
        %v515 = vrot.slane %v508, 7
        %v516 = vrot.slane %v509, 7
        %v517 = vsel %vm514, %v515, %v516
        %v518 = vrot.slane %v510, 7
        %v519 = vsel %vm514, %v516, %v518
        %v523 = vmin.f32 %v493, %v515
        %v524 = vmin.f32 %v494, %v517
        %v525 = vmin.f32 %v495, %v519
        %vm529 = vcmask 1043456
        %v530 = vrot.slane %v431, 4
        %v531 = vrot.slane %v432, 4
        %v532 = vsel %vm529, %v530, %v531
        %v533 = vrot.slane %v433, 4
        %v534 = vsel %vm529, %v531, %v533
        %v537 = vmin.f32 %v431, %v532
        %v538 = vmin.f32 %v432, %v534
        %v541 = vrot.slane %v537, 6
        %v542 = vrot.slane %v538, 6
        %v543 = vsel %vm327, %v541, %v542
        %v547 = vmin.f32 %v523, %v541
        %v548 = vmin.f32 %v524, %v543
        %v549 = vmin.f32 %v525, %v542
        %vm550 = vcmask 130050
        %551 = vst.msk [vmem:[%s274 - $0x2] sm:$0xfc] %vm550, %v547
        %vm552 = vcmask 130048
        %553 = vst.msk [vmem:[%s274 + $0x6] sm:$0xff] %vm552, %v548
        %vm554 = vcmask 123904
        %555 = vst.msk [vmem:[%s274 + $0xe] sm:$0x3] %vm554, %v549
        %s556 = sand.u32 %s139, 1
        %s557 = scalar_lea.sflag [#allocation3], %s556
        %s558 = sand.u32 %s139, 1
        %s559 = smul.addr %s558, 16
        %s560 = scalar_lea.vmem [#allocation2], %s559
        // Predicated region
        $region33: #{segmentation_wrapper_forward.3} parent=31 // pred_check
          %p561 = pneg %p149
        $region34: #{segmentation_wrapper_forward.3} parent=31 // pred_check_branch
          %563 = sbr.rel (%p561) target = $region36
        $region35: #{segmentation_wrapper_forward.3} parent=31 // pred_region
          %s564 = smul.u32 2, %s22
          %s566 = ssub.s32 256, 256
          %567 = vsyncadd %s557, %s566
          %s568 = smul.addr %s21, 2
          %s569 = sadd.s32 %s564, %s568
          %s570 = smul.addr %s569, 128
          %s571 = scalar_lea.hbm %s3, %s570
          %s572 = sshll.u32 %s560, 4
          %s573 = int_to_ptr.vmem [resolvable:$true] %s572
          %578 = dma.vmem_to_hbm [thread:$0]  %s573, 256, %s571, %s557, 128, 128, 8
        $region36: #{segmentation_wrapper_forward.3} parent=31 // pred_fallthru
          _
      $region32: #{segmentation_wrapper_forward.3} parent=5 // pred_fallthru
        _
      %p579 = scmp.le.s32.totalorder 2, %s12
      // Predicated region
      $region37: #{segmentation_wrapper_forward.3} parent=5 // pred_check
        %p580 = pneg %p579
      $region38: #{segmentation_wrapper_forward.3} parent=5 // pred_check_branch
        %582 = sbr.rel (%p580) target = $region40
      $region39: #{segmentation_wrapper_forward.3} parent=5 // pred_region
        %s583 = ssub.s32 %s12, 2
        // Predicated region
        $region41: #{segmentation_wrapper_forward.3} parent=39 // pred_check
          %p584 = pneg %p155
        $region42: #{segmentation_wrapper_forward.3} parent=39 // pred_check_branch
          %586 = sbr.rel (%p584) target = $region44
        $region43: #{segmentation_wrapper_forward.3} parent=39 // pred_region
          %s587 = sand.u32 %s140, 1
          %s588 = scalar_lea.sflag [#allocation3], %s587
          %s589 = sand.u32 %s140, 1
          %s590 = smul.addr %s589, 16
          %s591 = scalar_lea.vmem [#allocation2], %s590
          %592 = dma.done %s588, 256
        $region44: #{segmentation_wrapper_forward.3} parent=39 // pred_fallthru
          _
      $region40: #{segmentation_wrapper_forward.3} parent=5 // pred_fallthru
        _
    $region6: #{segmentation_wrapper_forward.3} parent=1 // loop_footer
      %s16 = sadd.s32 1, %s12
    $region7: #{segmentation_wrapper_forward.3} parent=1 // loop_footer_branch
      %11 = sbr.rel target = $region3
    $region8: #{segmentation_wrapper_forward.3} parent=1 // loop_exit
      _
    %593 = vsyncpa [#allocation3], 1
    %s594 = scalar_lea.sflag [#allocation3], 1
    %595 = vsyncpa %s594, 1

</llo_original>
